<compile_context>
chip_gen: v7x
topology: tpu7x:2x2x1
jax: 0.10.0
libtpu: 0.0.40
codegen_flags: <defaults>
</compile_context>

<pallas_src>
import jax
import jax.numpy as jnp
from jax.experimental import pallas as pl
from jax.experimental.pallas import tpu as pltpu

_LANES = 128


def _hsigmoid_kernel(x_ref, o_ref):
    x = x_ref[...]
    # relu6(x + 3) / 6  ==  clamp(x + 3, 0, 6) * (1/6)
    y = jnp.minimum(jnp.maximum(x + 3.0, 0.0), 6.0) * (1.0 / 6.0)
    o_ref[...] = y.astype(o_ref.dtype)


def _sublane_pack(dtype) -> int:
    # f32 -> 8, bf16/f16 -> 16, int8/fp8 -> 32 (sub-32-bit packs along sublanes)
    itemsize = jnp.dtype(dtype).itemsize
    return max(8, 32 // itemsize)


def hsigmoid(x, *, block_rows=4096):
    """Elementwise hsigmoid over an arbitrary-shaped array (NCHW in the demo)."""
    orig_shape = x.shape
    orig_dtype = x.dtype
    n = x.size
    itemsize = jnp.dtype(orig_dtype).itemsize

    flat = jnp.ravel(x)
    # Pad only to a multiple of 128 lanes, and only if needed (no extra HBM
    # pass in the common case where n % 128 == 0).
    n_pad = pl.cdiv(n, _LANES) * _LANES
    if n_pad != n:
        flat = jnp.pad(flat, (0, n_pad - n))
    rows = n_pad // _LANES
    slab = flat.reshape(rows, _LANES)

    pack = _sublane_pack(orig_dtype)
    # Large lane-dense tiles (~2 MiB for f32 at the default block_rows).
    tr = min(block_rows, rows)
    if tr < rows:
        # Keep the block's sublane extent a multiple of the packed-tile height
        # (required when the block doesn't cover the whole row axis).
        tr = max((tr // pack) * pack, pack)
    grid = (pl.cdiv(rows, tr),)  # partial final block is masked by Pallas

    out_slab = pl.pallas_call(
        _hsigmoid_kernel,
        out_shape=jax.ShapeDtypeStruct((rows, _LANES), orig_dtype),
        grid_spec=pltpu.PrefetchScalarGridSpec(
            num_scalar_prefetch=0,
            grid=grid,
            in_specs=[pl.BlockSpec((tr, _LANES), lambda i: (i, 0))],
            out_specs=pl.BlockSpec((tr, _LANES), lambda i: (i, 0)),
        ),
        compiler_params=pltpu.CompilerParams(
            dimension_semantics=("parallel",),
        ),
        cost_estimate=pl.CostEstimate(
            flops=4 * n,
            transcendentals=0,
            bytes_accessed=2 * n * itemsize,
        ),
    )(slab)

    out_flat = out_slab.reshape(-1)
    if n_pad != n:
        out_flat = out_flat[:n]
    return out_flat.reshape(orig_shape)


if __name__ == "__main__":
    key = jax.random.PRNGKey(0)
    # NCHW input, consistent with PyTorch conv-style activations.
    x = jax.random.normal(key, (2, 4, 16, 16), dtype=jnp.float32) * 4.0

    y = hsigmoid(x)
    jax.block_until_ready(y)

    # Reference check in plain JAX.
    y_ref = jnp.clip(x + 3.0, 0.0, 6.0) / 6.0
    assert y.shape == x.shape
    assert jnp.allclose(y, y_ref, atol=1e-6), "mismatch vs reference"
    print("KERNEL_OK")
</pallas_src>

<mosaic_0001>
module attributes {stable_mosaic.version = 11 : i64} {
  func.func @_hsigmoid_kernel(%arg0: i32, %arg1: memref<16x128xf32, #tpu.memory_space<vmem>>, %arg2: memref<16x128xf32, #tpu.memory_space<vmem>>) attributes {dimension_semantics = [#tpu.dimension_semantics<parallel>], iteration_bounds = array<i64: 1>, scalar_prefetch = 0 : i64, scratch_operands = 0 : i64, tpu.core_type = #tpu.core_type<tc>, window_params = [{transform_indices = @transform_0, window_bounds = array<i64: 16, 128>}, {transform_indices = @transform_1, window_bounds = array<i64: 16, 128>}]} {
    %c0 = arith.constant 0 : index
    %c0_0 = arith.constant 0 : index
    %0 = vector.load %arg1[%c0, %c0_0] : memref<16x128xf32, #tpu.memory_space<vmem>>, vector<16x128xf32>
    %cst = arith.constant 3.000000e+00 : f32
    %1 = vector.broadcast %cst : f32 to vector<16x128xf32>
    %2 = arith.addf %0, %1 : vector<16x128xf32>
    %cst_1 = arith.constant 0.000000e+00 : f32
    %3 = vector.broadcast %cst_1 : f32 to vector<16x128xf32>
    %4 = arith.maximumf %2, %3 : vector<16x128xf32>
    %cst_2 = arith.constant 6.000000e+00 : f32
    %5 = vector.broadcast %cst_2 : f32 to vector<16x128xf32>
    %6 = arith.minimumf %4, %5 : vector<16x128xf32>
    %cst_3 = arith.constant 0.166666672 : f32
    %7 = vector.broadcast %cst_3 : f32 to vector<16x128xf32>
    %8 = arith.mulf %6, %7 : vector<16x128xf32>
    %c0_4 = arith.constant 0 : index
    %c0_5 = arith.constant 0 : index
    %9 = vector.load %arg2[%c0_4, %c0_5] : memref<16x128xf32, #tpu.memory_space<vmem>>, vector<16x128xf32>
    tpu.vector_store %arg2[%c0_4, %c0_5], %8 {strides = array<i32>} : memref<16x128xf32, #tpu.memory_space<vmem>>, vector<16x128xf32>,
    return
  }
  func.func @transform_0(%arg0: i32) -> (i32, i32) {
    %c0_i32 = arith.constant 0 : i32
    %c0_i32_0 = arith.constant 0 : i32
    return %arg0, %c0_i32 : i32, i32
  }
  func.func @transform_1(%arg0: i32) -> (i32, i32) {
    %c0_i32 = arith.constant 0 : i32
    %c0_i32_0 = arith.constant 0 : i32
    return %arg0, %c0_i32 : i32, i32
  }
}

</mosaic_0001>

<llo_original>
// kernel: tpu_custom_call.1
$region0: #{tpu_custom_call.1}
  #allocation0 [shape = 'u32[]', space=smem, size = 0x4, offset = 0x4, fixed_abs, tag = 'smem constant byte address 0x4 - core index']
  #allocation1 [shape = 'u32[144,128]{1,0:T(1,128)}', space=vmem, size = 0x12000, scoped, tag = 'internal scratch']
  %s0 = inlined_call_operand.hbm [shape: f32[16,128], index: 0, kind: input, shape index: {}]
  %s1 = inlined_call_operand.hbm [shape: f32[16,128], index: 1, kind: output, shape index: {}]
  %s2 = sld [smem:[#allocation0]]
  $region18: #{tpu_custom_call.1} parent=0
    _
  %s4 = ssub.s32 1, %s2
  %s5 = scalar_select 0, %s4, %s2
  $region1: #{tpu_custom_call.1} parent=0
    #allocation2 [shape = 'u8[8192]{0}', space=vmem, size = 0x2000, scoped, tag = 'input window, operand 0, single buffered']
    #allocation3 [shape = 's32[1]{0}', space=sflag, size = 0x4, scoped, tag = 'scoped memory for tpu_custom_call.1']
    #allocation4 [shape = 's32[1]{0}', space=sflag, size = 0x4, scoped, tag = 'scoped memory for tpu_custom_call.1']
    #allocation5 [shape = 'u8[8192]{0}', space=vmem, size = 0x2000, scoped, tag = 'output window, operand 0, single buffered']
    %6 = vsyncpa [#allocation3], 0
    %7 = vsyncpa [#allocation4], 0
    // Predicated region
    $region2: #{tpu_custom_call.1} parent=1 // pred_check
      _
    $region3: #{tpu_custom_call.1} parent=1 // pred_check_branch
      %9 = sbr.rel (0) target = $region5
    $region4: #{tpu_custom_call.1} parent=1 // pred_region
      %s11 = ssub.s32 256, 256
      %12 = vsyncadd [#allocation3], %s11
      %s13 = sshll.u32 [#allocation2], 4
      %s14 = int_to_ptr.vmem [resolvable:$true] %s13
      %19 = dma.hbm_to_vmem [thread:$0]  %s0, 256, %s14, [#allocation3], 128, 128, 8
    $region5: #{tpu_custom_call.1} parent=1 // pred_fallthru
      _
    // Predicated region
    $region6: #{tpu_custom_call.1} parent=1 // pred_check
      _
    $region7: #{tpu_custom_call.1} parent=1 // pred_check_branch
      %21 = sbr.rel (0) target = $region9
    $region8: #{tpu_custom_call.1} parent=1 // pred_region
      %22 = dma.done [#allocation3], 256
    $region9: #{tpu_custom_call.1} parent=1 // pred_fallthru
      _
    %v23 = vld [vmem:[#allocation2] sm:$0xff]
    %v24 = vld [vmem:[#allocation2 + $0x8] sm:$0xff]
    %v25 = vadd.f32 %v23, 3.0
    %v26 = vadd.f32 %v24, 3.0
    %v27 = vmax.f32 %v25, 0.0
    %v28 = vmax.f32 %v26, 0.0
    %v29 = vmin.f32 %v27, 6.0
    %v30 = vmin.f32 %v28, 6.0
    %v31 = vmul.f32 %v29, 0.16666667
    %v32 = vmul.f32 %v30, 0.16666667
    %33 = vst [vmem:[#allocation5] sm:$0xff] %v31
    %34 = vst [vmem:[#allocation5 + $0x8] sm:$0xff] %v32
    // Predicated region
    $region10: #{tpu_custom_call.1} parent=1 // pred_check
      _
    $region11: #{tpu_custom_call.1} parent=1 // pred_check_branch
      %36 = sbr.rel (0) target = $region13
    $region12: #{tpu_custom_call.1} parent=1 // pred_region
      %s38 = ssub.s32 256, 256
      %39 = vsyncadd [#allocation4], %s38
      %s40 = sshll.u32 [#allocation5], 4
      %s41 = int_to_ptr.vmem [resolvable:$true] %s40
      %46 = dma.vmem_to_hbm [thread:$0]  %s41, 256, %s1, [#allocation4], 128, 128, 8
    $region13: #{tpu_custom_call.1} parent=1 // pred_fallthru
      _
    // Predicated region
    $region14: #{tpu_custom_call.1} parent=1 // pred_check
      _
    $region15: #{tpu_custom_call.1} parent=1 // pred_check_branch
      %48 = sbr.rel (0) target = $region17
    $region16: #{tpu_custom_call.1} parent=1 // pred_region
      %49 = dma.done [#allocation4], 256
    $region17: #{tpu_custom_call.1} parent=1 // pred_fallthru
      _
    %50 = vsyncpa [#allocation3], 1
    %51 = vsyncpa [#allocation4], 1

</llo_original>
